<compile_context>
chip_gen: v7x
topology: tpu7x:2x2x1
jax: 0.10.0
libtpu: 0.0.40
codegen_flags: <defaults>
</compile_context>

<pallas_src>
import functools

import jax
import jax.numpy as jnp
from jax.experimental import pallas as pl
from jax.experimental.pallas import tpu as pltpu

INPUT_LEN = 36 + 36 * 37 + 36 + 1 + 4   # 1409
OUTPUT_LEN = 38
HIDDEN = 128

SELU_ALPHA = 1.6732632423543772848170429916717
SELU_SCALE = 1.0507009873554804934193349852946
NEG_INF = -1e30


def _round_up(x, m):
    return (x + m - 1) // m * m


IN_PAD = _round_up(INPUT_LEN, 128)    # 1536
OUT_PAD = _round_up(OUTPUT_LEN, 128)  # 128


def _selu(x):
    # SELU(x) = scale * (x if x > 0 else alpha * (exp(x) - 1)), computed in f32.
    return SELU_SCALE * jnp.where(x > 0, x, SELU_ALPHA * (jnp.exp(x) - 1.0))


def dqn_kernel(x_ref, w1_ref, s1_ref, b1_ref, w2_ref, b2_ref, w3_ref, b3_ref,
               out_ref):
    x = x_ref[...]                                                # (TB, IN_PAD) bf16

    # Layer 1: W1 is int8 in HBM; dequantize with a two-step cast (i8 -> f32
    # -> bf16, values <= 127 are exact) and run a bf16 x bf16 MXU matmul with
    # f32 accumulation.  Per-channel scale is applied to the accumulator.
    w1 = w1_ref[...].astype(jnp.float32).astype(jnp.bfloat16)
    h1 = jnp.dot(x, w1, preferred_element_type=jnp.float32)
    h1 = _selu(h1 * s1_ref[...] + b1_ref[...])                    # (TB, 128) f32

    # Layer 2.
    h2 = jnp.dot(h1.astype(jnp.bfloat16), w2_ref[...],
                 preferred_element_type=jnp.float32)
    h2 = _selu(h2 + b2_ref[...])                                  # (TB, 128) f32

    # Layer 3.  b3 already contains -1e30 in the padded action columns, so the
    # softmax mask is free (padded columns underflow to exactly 0).
    logits = jnp.dot(h2.astype(jnp.bfloat16), w3_ref[...],
                     preferred_element_type=jnp.float32) + b3_ref[...]

    # Softmax over the last dim (f32).  Exact divide -> rows sum to 1 to f32
    # precision (the kernel is DMA-bound, the divide costs nothing visible).
    m = jnp.max(logits, axis=-1, keepdims=True)
    e = jnp.exp(logits - m)
    denom = jnp.sum(e, axis=-1, keepdims=True)
    out_ref[...] = e / denom


def init_params(key, n_obs=INPUT_LEN, n_actions=OUTPUT_LEN, hidden=HIDDEN):
    """Deterministic init mimicking nn.Linear's U(-1/sqrt(fan_in), 1/sqrt(fan_in))."""
    ks = jax.random.split(key, 6)

    def lin(kw, kb, fan_in, fan_out):
        bound = 1.0 / jnp.sqrt(jnp.float32(fan_in))
        w = jax.random.uniform(kw, (fan_in, fan_out), jnp.float32, -bound, bound)
        b = jax.random.uniform(kb, (fan_out,), jnp.float32, -bound, bound)
        return w, b

    w1, b1 = lin(ks[0], ks[1], n_obs, hidden)
    w2, b2 = lin(ks[2], ks[3], hidden, hidden)
    w3, b3 = lin(ks[4], ks[5], hidden, n_actions)
    return (w1, b1, w2, b2, w3, b3)


def prepare_params(params):
    """One-time (param-load) padding / quantization / casting of the weights."""
    w1, b1, w2, b2, w3, b3 = params

    # Weight-only int8 quantization of W1 (the dominant 1536x128 HBM transfer),
    # symmetric per-output-channel.  Padded rows stay zero.
    s1 = jnp.maximum(jnp.max(jnp.abs(w1), axis=0, keepdims=True), 1e-12) / 127.0
    w1_q = jnp.clip(jnp.round(w1 / s1), -127, 127).astype(jnp.int8)
    w1_qp = jnp.zeros((IN_PAD, HIDDEN), jnp.int8).at[:INPUT_LEN, :].set(w1_q)
    # TODO(synk): on v7x an fp8 (e4m3) W1 fed straight to the MXU would avoid
    # the in-kernel dequant cast; int8-with-dequant is kept for portability.

    w2_b = w2.astype(jnp.bfloat16)
    w3_p = (jnp.zeros((HIDDEN, OUT_PAD), jnp.bfloat16)
            .at[:, :OUTPUT_LEN].set(w3.astype(jnp.bfloat16)))

    # Fold the "mask padded actions" step into the bias.
    b3_p = jnp.full((OUT_PAD,), NEG_INF, jnp.float32).at[:OUTPUT_LEN].set(b3)

    return (w1_qp, s1.astype(jnp.float32), b1.reshape(1, HIDDEN),
            w2_b, b2.reshape(1, HIDDEN), w3_p, b3_p.reshape(1, OUT_PAD))


@functools.partial(jax.jit, static_argnames=("block_batch",))
def dqn_forward_pallas(x, prepared, *, block_batch=256):
    """x: (B, INPUT_LEN) f32; prepared: output of prepare_params."""
    w1_q, s1, b1, w2, b2, w3, b3 = prepared
    B = x.shape[0]

    # Batch tile: multiple of 16 (bf16 sublane packing), capped at block_batch.
    tb = _round_up(min(block_batch, _round_up(B, 16)), 16)
    b_pad = _round_up(B, tb)
    n_tiles = b_pad // tb

    # Pad/cast the activation; allow_input_fusion lets XLA fuse this producer
    # into the pallas call instead of materializing x_p in HBM.
    x_p = (jnp.zeros((b_pad, IN_PAD), jnp.bfloat16)
           .at[:B, :INPUT_LEN].set(x.astype(jnp.bfloat16)))

    weight_bytes = (IN_PAD * HIDDEN * 1 + HIDDEN * HIDDEN * 2
                    + HIDDEN * OUT_PAD * 2 + (3 * HIDDEN + OUT_PAD) * 4)
    cost = pl.CostEstimate(
        flops=2 * b_pad * (IN_PAD * HIDDEN + HIDDEN * HIDDEN + HIDDEN * OUT_PAD),
        transcendentals=b_pad * (2 * HIDDEN + OUT_PAD),
        bytes_accessed=weight_bytes + b_pad * IN_PAD * 2 + b_pad * OUT_PAD * 4,
    )

    out_pad = pl.pallas_call(
        dqn_kernel,
        out_shape=jax.ShapeDtypeStruct((b_pad, OUT_PAD), jnp.float32),
        grid=(n_tiles,),
        in_specs=[
            pl.BlockSpec((tb, IN_PAD), lambda i: (i, 0)),        # x: tiled over batch
            pl.BlockSpec((IN_PAD, HIDDEN), lambda i: (0, 0)),    # W1 (resident)
            pl.BlockSpec((1, HIDDEN), lambda i: (0, 0)),         # s1
            pl.BlockSpec((1, HIDDEN), lambda i: (0, 0)),         # b1
            pl.BlockSpec((HIDDEN, HIDDEN), lambda i: (0, 0)),    # W2
            pl.BlockSpec((1, HIDDEN), lambda i: (0, 0)),         # b2
            pl.BlockSpec((HIDDEN, OUT_PAD), lambda i: (0, 0)),   # W3
            pl.BlockSpec((1, OUT_PAD), lambda i: (0, 0)),        # b3
        ],
        out_specs=pl.BlockSpec((tb, OUT_PAD), lambda i: (i, 0)),
        compiler_params=pltpu.CompilerParams(
            dimension_semantics=("parallel",),                   # megacore on v7x
            allow_input_fusion=[True] + [False] * 7,             # fuse x pad/cast
        ),
        cost_estimate=cost,
    )(x_p, w1_q, s1, b1, w2, b2, w3, b3)

    return out_pad[:B, :OUTPUT_LEN]


def dqn_forward_ref_prepared(x, prepared):
    """Pure-JAX mirror of exactly what the kernel computes (padded + quantized)."""
    w1_q, s1, b1, w2, b2, w3, b3 = prepared
    B = x.shape[0]
    x_p = (jnp.zeros((B, IN_PAD), jnp.bfloat16)
           .at[:, :INPUT_LEN].set(x.astype(jnp.bfloat16)))
    w1 = w1_q.astype(jnp.float32).astype(jnp.bfloat16)
    h = _selu(jnp.dot(x_p, w1, preferred_element_type=jnp.float32) * s1 + b1)
    h = _selu(jnp.dot(h.astype(jnp.bfloat16), w2,
                      preferred_element_type=jnp.float32) + b2)
    logits = jnp.dot(h.astype(jnp.bfloat16), w3,
                     preferred_element_type=jnp.float32) + b3
    return jax.nn.softmax(logits, axis=-1)[:, :OUTPUT_LEN]


def dqn_forward_ref_f32(x, params):
    """Full-precision reference matching the original PyTorch module."""
    w1, b1, w2, b2, w3, b3 = params
    h = _selu(x @ w1 + b1)
    h = _selu(h @ w2 + b2)
    return jax.nn.softmax(h @ w3 + b3, axis=-1)


if __name__ == "__main__":
    key = jax.random.PRNGKey(0)
    kp, kx = jax.random.split(key)

    params = init_params(kp)
    prepared = prepare_params(params)          # one-time pad + quant + cast

    B = 8
    x = jax.random.normal(kx, (B, INPUT_LEN), jnp.float32)

    probs = dqn_forward_pallas(x, prepared)
    probs = jax.block_until_ready(probs)

    assert probs.shape == (B, OUTPUT_LEN)
    # Exact divide inside the kernel -> rows sum to 1 to f32 precision.
    assert jnp.allclose(jnp.sum(probs, axis=-1), 1.0, atol=1e-4)

    # Matches the kernel's own (bf16 / int8-W1) arithmetic tightly.
    ref_match = dqn_forward_ref_prepared(x, prepared)
    assert jnp.allclose(probs, ref_match, atol=2e-3, rtol=2e-3)

    # Stays close to the original f32 model semantics.
    ref_f32 = dqn_forward_ref_f32(x, params)
    assert jnp.allclose(probs, ref_f32, atol=1e-2)

    print("KERNEL_OK")
</pallas_src>

<mosaic_0001>
module attributes {stable_mosaic.version = 11 : i64} {
  func.func @dqn_kernel(%arg0: i32, %arg1: memref<16x1536xbf16, #tpu.memory_space<vmem>>, %arg2: memref<1536x128xi8, #tpu.memory_space<vmem>>, %arg3: memref<1x128xf32, #tpu.memory_space<vmem>>, %arg4: memref<1x128xf32, #tpu.memory_space<vmem>>, %arg5: memref<128x128xbf16, #tpu.memory_space<vmem>>, %arg6: memref<1x128xf32, #tpu.memory_space<vmem>>, %arg7: memref<128x128xbf16, #tpu.memory_space<vmem>>, %arg8: memref<1x128xf32, #tpu.memory_space<vmem>>, %arg9: memref<16x128xf32, #tpu.memory_space<vmem>>) attributes {dimension_semantics = [#tpu.dimension_semantics<parallel>], iteration_bounds = array<i64: 1>, scalar_prefetch = 0 : i64, scratch_operands = 0 : i64, tpu.core_type = #tpu.core_type<tc>, window_params = [{transform_indices = @transform_0, window_bounds = array<i64: 16, 1536>}, {pipeline_mode = #tpu.pipeline_mode<synchronous>, transform_indices = @transform_1, window_bounds = array<i64: 1536, 128>}, {pipeline_mode = #tpu.pipeline_mode<synchronous>, transform_indices = @transform_2, window_bounds = array<i64: 1, 128>}, {pipeline_mode = #tpu.pipeline_mode<synchronous>, transform_indices = @transform_3, window_bounds = array<i64: 1, 128>}, {pipeline_mode = #tpu.pipeline_mode<synchronous>, transform_indices = @transform_4, window_bounds = array<i64: 128, 128>}, {pipeline_mode = #tpu.pipeline_mode<synchronous>, transform_indices = @transform_5, window_bounds = array<i64: 1, 128>}, {pipeline_mode = #tpu.pipeline_mode<synchronous>, transform_indices = @transform_6, window_bounds = array<i64: 128, 128>}, {pipeline_mode = #tpu.pipeline_mode<synchronous>, transform_indices = @transform_7, window_bounds = array<i64: 1, 128>}, {transform_indices = @transform_8, window_bounds = array<i64: 16, 128>}]} {
    %c0 = arith.constant 0 : index
    %c0_0 = arith.constant 0 : index
    %0 = vector.load %arg1[%c0, %c0_0] : memref<16x1536xbf16, #tpu.memory_space<vmem>>, vector<16x1536xbf16>
    %c0_1 = arith.constant 0 : index
    %c0_2 = arith.constant 0 : index
    %1 = vector.load %arg2[%c0_1, %c0_2] : memref<1536x128xi8, #tpu.memory_space<vmem>>, vector<1536x128xi8>
    %2 = arith.sitofp %1 : vector<1536x128xi8> to vector<1536x128xf32>
    %3 = arith.truncf %2 : vector<1536x128xf32> to vector<1536x128xbf16>
    %cst = arith.constant dense<0.000000e+00> : vector<16x128xf32>
    %4 = tpu.matmul %0, %3, %cst {dimension_numbers = #tpu.dot_dimension_numbers<[1], [0], [0], [1], [0, 0, 1, 1], [], []>} : vector<16x1536xbf16>, vector<1536x128xbf16>, vector<16x128xf32> -> vector<16x128xf32>
    %c0_3 = arith.constant 0 : index
    %c0_4 = arith.constant 0 : index
    %5 = vector.load %arg3[%c0_3, %c0_4] : memref<1x128xf32, #tpu.memory_space<vmem>>, vector<1x128xf32>
    %6 = vector.broadcast %5 : vector<1x128xf32> to vector<16x128xf32>
    %7 = arith.mulf %4, %6 : vector<16x128xf32>
    %c0_5 = arith.constant 0 : index
    %c0_6 = arith.constant 0 : index
    %8 = vector.load %arg4[%c0_5, %c0_6] : memref<1x128xf32, #tpu.memory_space<vmem>>, vector<1x128xf32>
    %9 = vector.broadcast %8 : vector<1x128xf32> to vector<16x128xf32>
    %10 = arith.addf %7, %9 : vector<16x128xf32>
    %cst_7 = arith.constant 0.000000e+00 : f32
    %11 = vector.broadcast %cst_7 : f32 to vector<16x128xf32>
    %12 = arith.cmpf ogt, %10, %11 : vector<16x128xf32>
    %13 = math.exp %10 : vector<16x128xf32>
    %cst_8 = arith.constant 1.000000e+00 : f32
    %14 = vector.broadcast %cst_8 : f32 to vector<16x128xf32>
    %15 = arith.subf %13, %14 : vector<16x128xf32>
    %cst_9 = arith.constant 1.67326319 : f32
    %16 = vector.broadcast %cst_9 : f32 to vector<16x128xf32>
    %17 = arith.mulf %16, %15 : vector<16x128xf32>
    %18 = arith.select %12, %10, %17 : vector<16x128xi1>, vector<16x128xf32>
    %cst_10 = arith.constant 1.05070102 : f32
    %19 = vector.broadcast %cst_10 : f32 to vector<16x128xf32>
    %20 = arith.mulf %19, %18 : vector<16x128xf32>
    %21 = arith.truncf %20 : vector<16x128xf32> to vector<16x128xbf16>
    %c0_11 = arith.constant 0 : index
    %c0_12 = arith.constant 0 : index
    %22 = vector.load %arg5[%c0_11, %c0_12] : memref<128x128xbf16, #tpu.memory_space<vmem>>, vector<128x128xbf16>
    %cst_13 = arith.constant dense<0.000000e+00> : vector<16x128xf32>
    %23 = tpu.matmul %21, %22, %cst_13 {dimension_numbers = #tpu.dot_dimension_numbers<[1], [0], [0], [1], [0, 0, 1, 1], [], []>} : vector<16x128xbf16>, vector<128x128xbf16>, vector<16x128xf32> -> vector<16x128xf32>
    %c0_14 = arith.constant 0 : index
    %c0_15 = arith.constant 0 : index
    %24 = vector.load %arg6[%c0_14, %c0_15] : memref<1x128xf32, #tpu.memory_space<vmem>>, vector<1x128xf32>
    %25 = vector.broadcast %24 : vector<1x128xf32> to vector<16x128xf32>
    %26 = arith.addf %23, %25 : vector<16x128xf32>
    %cst_16 = arith.constant 0.000000e+00 : f32
    %27 = vector.broadcast %cst_16 : f32 to vector<16x128xf32>
    %28 = arith.cmpf ogt, %26, %27 : vector<16x128xf32>
    %29 = math.exp %26 : vector<16x128xf32>
    %cst_17 = arith.constant 1.000000e+00 : f32
    %30 = vector.broadcast %cst_17 : f32 to vector<16x128xf32>
    %31 = arith.subf %29, %30 : vector<16x128xf32>
    %cst_18 = arith.constant 1.67326319 : f32
    %32 = vector.broadcast %cst_18 : f32 to vector<16x128xf32>
    %33 = arith.mulf %32, %31 : vector<16x128xf32>
    %34 = arith.select %28, %26, %33 : vector<16x128xi1>, vector<16x128xf32>
    %cst_19 = arith.constant 1.05070102 : f32
    %35 = vector.broadcast %cst_19 : f32 to vector<16x128xf32>
    %36 = arith.mulf %35, %34 : vector<16x128xf32>
    %37 = arith.truncf %36 : vector<16x128xf32> to vector<16x128xbf16>
    %c0_20 = arith.constant 0 : index
    %c0_21 = arith.constant 0 : index
    %38 = vector.load %arg7[%c0_20, %c0_21] : memref<128x128xbf16, #tpu.memory_space<vmem>>, vector<128x128xbf16>
    %cst_22 = arith.constant dense<0.000000e+00> : vector<16x128xf32>
    %39 = tpu.matmul %37, %38, %cst_22 {dimension_numbers = #tpu.dot_dimension_numbers<[1], [0], [0], [1], [0, 0, 1, 1], [], []>} : vector<16x128xbf16>, vector<128x128xbf16>, vector<16x128xf32> -> vector<16x128xf32>
    %c0_23 = arith.constant 0 : index
    %c0_24 = arith.constant 0 : index
    %40 = vector.load %arg8[%c0_23, %c0_24] : memref<1x128xf32, #tpu.memory_space<vmem>>, vector<1x128xf32>
    %41 = vector.broadcast %40 : vector<1x128xf32> to vector<16x128xf32>
    %42 = arith.addf %39, %41 : vector<16x128xf32>
    %cst_25 = arith.constant dense<0xFF800000> : vector<16xf32>
    %43 = vector.multi_reduction <maximumf>, %42, %cst_25 [1] : vector<16x128xf32> to vector<16xf32>
    %44 = vector.shape_cast %43 : vector<16xf32> to vector<16x1xf32>
    %45 = vector.broadcast %44 : vector<16x1xf32> to vector<16x128xf32>
    %46 = arith.subf %42, %45 : vector<16x128xf32>
    %47 = math.exp %46 : vector<16x128xf32>
    %cst_26 = arith.constant dense<0.000000e+00> : vector<16xf32>
    %48 = vector.multi_reduction <add>, %47, %cst_26 [1] : vector<16x128xf32> to vector<16xf32>
    %49 = vector.shape_cast %48 : vector<16xf32> to vector<16x1xf32>
    %50 = vector.broadcast %49 : vector<16x1xf32> to vector<16x128xf32>
    %51 = arith.divf %47, %50 : vector<16x128xf32>
    %c0_27 = arith.constant 0 : index
    %c0_28 = arith.constant 0 : index
    %52 = vector.load %arg9[%c0_27, %c0_28] : memref<16x128xf32, #tpu.memory_space<vmem>>, vector<16x128xf32>
    tpu.vector_store %arg9[%c0_27, %c0_28], %51 {strides = array<i32>} : memref<16x128xf32, #tpu.memory_space<vmem>>, vector<16x128xf32>,
    return
  }
  func.func @transform_0(%arg0: i32) -> (i32, i32) {
    %c0_i32 = arith.constant 0 : i32
    %c0_i32_0 = arith.constant 0 : i32
    return %arg0, %c0_i32 : i32, i32
  }
  func.func @transform_1(%arg0: i32) -> (i32, i32) {
    %c0_i32 = arith.constant 0 : i32
    %c0_i32_0 = arith.constant 0 : i32
    %c0_i32_1 = arith.constant 0 : i32
    return %c0_i32, %c0_i32_0 : i32, i32
  }
  func.func @transform_2(%arg0: i32) -> (i32, i32) {
    %c0_i32 = arith.constant 0 : i32
    %c0_i32_0 = arith.constant 0 : i32
    %c0_i32_1 = arith.constant 0 : i32
    return %c0_i32, %c0_i32_0 : i32, i32
  }
  func.func @transform_3(%arg0: i32) -> (i32, i32) {
    %c0_i32 = arith.constant 0 : i32
    %c0_i32_0 = arith.constant 0 : i32
    %c0_i32_1 = arith.constant 0 : i32
    return %c0_i32, %c0_i32_0 : i32, i32
  }
  func.func @transform_4(%arg0: i32) -> (i32, i32) {
    %c0_i32 = arith.constant 0 : i32
    %c0_i32_0 = arith.constant 0 : i32
    %c0_i32_1 = arith.constant 0 : i32
    return %c0_i32, %c0_i32_0 : i32, i32
  }
  func.func @transform_5(%arg0: i32) -> (i32, i32) {
    %c0_i32 = arith.constant 0 : i32
    %c0_i32_0 = arith.constant 0 : i32
    %c0_i32_1 = arith.constant 0 : i32
    return %c0_i32, %c0_i32_0 : i32, i32
  }
  func.func @transform_6(%arg0: i32) -> (i32, i32) {
    %c0_i32 = arith.constant 0 : i32
    %c0_i32_0 = arith.constant 0 : i32
    %c0_i32_1 = arith.constant 0 : i32
    return %c0_i32, %c0_i32_0 : i32, i32
  }
  func.func @transform_7(%arg0: i32) -> (i32, i32) {
    %c0_i32 = arith.constant 0 : i32
    %c0_i32_0 = arith.constant 0 : i32
    %c0_i32_1 = arith.constant 0 : i32
    return %c0_i32, %c0_i32_0 : i32, i32
  }
  func.func @transform_8(%arg0: i32) -> (i32, i32) {
    %c0_i32 = arith.constant 0 : i32
    %c0_i32_0 = arith.constant 0 : i32
    return %arg0, %c0_i32 : i32, i32
  }
}

</mosaic_0001>

<llo_original>
// kernel: dqn_forward_pallas.2
$region0: #{dqn_forward_pallas.2}
  #allocation0 [shape = 'u32[]', space=smem, size = 0x4, offset = 0x4, fixed_abs, tag = 'smem constant byte address 0x4 - core index']
  #allocation1 [shape = 'u32[144,128]{1,0:T(1,128)}', space=vmem, size = 0x12000, scoped, tag = 'internal scratch']
  #allocation2 [shape = 'u32[2048]{0}', space=vmem, size = 0x2000, scoped, tag = 'scoped memory for dqn_forward_pallas.2']
  #allocation3 [shape = 'u32[2048]{0}', space=vmem, size = 0x2000, scoped, tag = 'scoped memory for dqn_forward_pallas.2']
  #allocation4 [shape = 'u32[2048]{0}', space=vmem, size = 0x2000, scoped, tag = 'scoped memory for dqn_forward_pallas.2']
  #allocation5 [shape = 'u32[2048]{0}', space=vmem, size = 0x2000, scoped, tag = 'scoped memory for dqn_forward_pallas.2']
  #allocation6 [shape = 'u32[2048]{0}', space=vmem, size = 0x2000, scoped, tag = 'scoped memory for dqn_forward_pallas.2']
  %s0 = inlined_call_operand.hbm [shape: s8[1536,128], index: 0, kind: input, shape index: {}]
  %s1 = inlined_call_operand.vmem [shape: f32[1,128], index: 1, kind: input, shape index: {}]
  %s2 = inlined_call_operand.vmem [shape: f32[1,128], index: 2, kind: input, shape index: {}]
  %s3 = inlined_call_operand.vmem [shape: bf16[128,128], index: 3, kind: input, shape index: {}]
  %s4 = inlined_call_operand.vmem [shape: f32[1,128], index: 4, kind: input, shape index: {}]
  %s5 = inlined_call_operand.vmem [shape: bf16[128,128], index: 5, kind: input, shape index: {}]
  %s6 = inlined_call_operand.vmem [shape: f32[1,128], index: 6, kind: input, shape index: {}]
  %s7 = inlined_call_operand.vmem [shape: bf16[8,1409], index: 7, kind: input, shape index: {}]
  %s8 = inlined_call_operand.<no memory space> [shape: bf16[], index: 8, kind: input, shape index: {}]
  %s9 = inlined_call_operand.vmem [shape: f32[16,128], index: 9, kind: output, shape index: {}]
  %s10 = sld [smem:[#allocation0]]
  $region46: #{dqn_forward_pallas.2} parent=0
    _
  %s12 = ssub.s32 1, %s10
  %s13 = scalar_select 0, %s12, %s10
  %v14 = vstv %s8
  %v15 = vunpack.i.l.bf16 %v14
  %v17 = vunpack.i.h.bf16 %v14
  $region1: #{dqn_forward_pallas.2} parent=0
    #allocation7 [shape = 'u8[196608]{0}', space=vmem, size = 0x30000, scoped, tag = 'input window, operand 1, single buffered']
    #allocation8 [shape = 's32[1]{0}', space=sflag, size = 0x4, scoped, tag = 'scoped memory for dqn_forward_pallas.2']
    #allocation9 [shape = 'u8[49152]{0}', space=vmem, size = 0xc000, dematerialized = true, scoped, tag = 'FusionAdapter Buffer %fusion.1 = bf16[16,1536]{1,0:T(8,128)(2,1)} fusion(%param_7.1, %param_8), kind=kLoop, calls=%fused_computation.1.clone, metadata={op_name="jit(dqn_forward_pallas)/scatter" stack_frame_id=9}']
    %19 = vsyncpa [#allocation8], 0
    // Predicated region
    $region2: #{dqn_forward_pallas.2} parent=1 // pred_check
      _
    $region3: #{dqn_forward_pallas.2} parent=1 // pred_check_branch
      %21 = sbr.rel (0) target = $region5
    $region4: #{dqn_forward_pallas.2} parent=1 // pred_region
      _
    $region5: #{dqn_forward_pallas.2} parent=1 // pred_fallthru
      _
    // Predicated region
    $region6: #{dqn_forward_pallas.2} parent=1 // pred_check
      _
    $region7: #{dqn_forward_pallas.2} parent=1 // pred_check_branch
      %23 = sbr.rel (0) target = $region9
    $region8: #{dqn_forward_pallas.2} parent=1 // pred_region
      %s25 = ssub.s32 6144, 6144
      %26 = vsyncadd [#allocation8], %s25
      %s27 = sshll.u32 [#allocation7], 4
      %s28 = int_to_ptr.vmem [resolvable:$true] %s27
      %33 = dma.hbm_to_vmem [thread:$0]  %s0, 6144, %s28, [#allocation8], 128, 128, 8
    $region9: #{dqn_forward_pallas.2} parent=1 // pred_fallthru
      _
    // Predicated region
    $region10: #{dqn_forward_pallas.2} parent=1 // pred_check
      _
    $region11: #{dqn_forward_pallas.2} parent=1 // pred_check_branch
      %35 = sbr.rel (0) target = $region13
    $region12: #{dqn_forward_pallas.2} parent=1 // pred_region
      _
    $region13: #{dqn_forward_pallas.2} parent=1 // pred_fallthru
      _
    // Predicated region
    $region14: #{dqn_forward_pallas.2} parent=1 // pred_check
      _
    $region15: #{dqn_forward_pallas.2} parent=1 // pred_check_branch
      %37 = sbr.rel (0) target = $region17
    $region16: #{dqn_forward_pallas.2} parent=1 // pred_region
      _
    $region17: #{dqn_forward_pallas.2} parent=1 // pred_fallthru
      _
    // Predicated region
    $region18: #{dqn_forward_pallas.2} parent=1 // pred_check
      _
    $region19: #{dqn_forward_pallas.2} parent=1 // pred_check_branch
      %39 = sbr.rel (0) target = $region21
    $region20: #{dqn_forward_pallas.2} parent=1 // pred_region
      _
    $region21: #{dqn_forward_pallas.2} parent=1 // pred_fallthru
      _
    // Predicated region
    $region22: #{dqn_forward_pallas.2} parent=1 // pred_check
      _
    $region23: #{dqn_forward_pallas.2} parent=1 // pred_check_branch
      %41 = sbr.rel (0) target = $region25
    $region24: #{dqn_forward_pallas.2} parent=1 // pred_region
      _
    $region25: #{dqn_forward_pallas.2} parent=1 // pred_fallthru
      _
    // Predicated region
    $region26: #{dqn_forward_pallas.2} parent=1 // pred_check
      _
    $region27: #{dqn_forward_pallas.2} parent=1 // pred_check_branch
      %43 = sbr.rel (0) target = $region29
    $region28: #{dqn_forward_pallas.2} parent=1 // pred_region
      _
    $region29: #{dqn_forward_pallas.2} parent=1 // pred_fallthru
      _
    // Predicated region
    $region30: #{dqn_forward_pallas.2} parent=1 // pred_check
      _
    $region31: #{dqn_forward_pallas.2} parent=1 // pred_check_branch
      %45 = sbr.rel (0) target = $region33
    $region32: #{dqn_forward_pallas.2} parent=1 // pred_region
      _
    $region33: #{dqn_forward_pallas.2} parent=1 // pred_fallthru
      _
    // Predicated region
    $region34: #{dqn_forward_pallas.2} parent=1 // pred_check
      _
    $region35: #{dqn_forward_pallas.2} parent=1 // pred_check_branch
      %47 = sbr.rel (0) target = $region37
    $region36: #{dqn_forward_pallas.2} parent=1 // pred_region
      %48 = dma.done [#allocation8], 6144
    $region37: #{dqn_forward_pallas.2} parent=1 // pred_fallthru
      _
    %s50 = sor.u32 255, 127
    %s51 = sand.u32 %s50, 85
    %s52 = sshrl.u32 %s51, 1
    %s53 = sor.u32 %s51, %s52
    %s54 = sand.u32 51, %s53
    %s55 = sshrl.u32 %s54, 2
    %s56 = sor.u32 %s54, %s55
    %s57 = sand.u32 15, %s56
    %v58 = vld [vmem:[%s7] sm:%s57]
    %v59 = vunpack.c.l.bf16 %v58
    %v60 = vunpack.c.h.bf16 %v58
    %v61 = vlaneseq
    %v62 = vand.u32 %v61, 127
    %vm64 = vcmp.lt.s32.totalorder %v62, 1409
    %v65 = vsel %vm64, %v59, %v15
    %v66 = vpack.c.bf16 0.0, %v65
    %68 = vst [vmem:[#allocation9] sm:$0xf] %v66
    %s69 = scalar_lea.vmem %s7, 4
    %s71 = sor.u32 255, 127
    %s72 = sand.u32 %s71, 85
    %s73 = sshrl.u32 %s72, 1
    %s74 = sor.u32 %s72, %s73
    %s75 = sand.u32 51, %s74
    %s76 = sshrl.u32 %s75, 2
    %s77 = sor.u32 %s75, %s76
    %s78 = sand.u32 15, %s77
    %v79 = vld [vmem:[%s69] sm:%s78]
    %v80 = vunpack.c.l.bf16 %v79
    %v81 = vunpack.c.h.bf16 %v79
    %v82 = vlaneseq
    %v83 = vand.u32 %v82, 127
    %v84 = vadd.s32 %v83, 128
    %vm85 = vcmp.lt.s32.totalorder %v84, 1409
    %v86 = vsel %vm85, %v80, %v15
    %s87 = scalar_lea.vmem [#allocation9], 4
    %v88 = vpack.c.bf16 0.0, %v86
    %90 = vst [vmem:[%s87] sm:$0xf] %v88
    %s91 = scalar_lea.vmem %s7, 8
    %s93 = sor.u32 255, 127
    %s94 = sand.u32 %s93, 85
    %s95 = sshrl.u32 %s94, 1
    %s96 = sor.u32 %s94, %s95
    %s97 = sand.u32 51, %s96
    %s98 = sshrl.u32 %s97, 2
    %s99 = sor.u32 %s97, %s98
    %s100 = sand.u32 15, %s99
    %v101 = vld [vmem:[%s91] sm:%s100]
    %v102 = vunpack.c.l.bf16 %v101
    %v103 = vunpack.c.h.bf16 %v101
    %v104 = vlaneseq
    %v105 = vand.u32 %v104, 127
    %v106 = vadd.s32 %v105, 256
    %vm107 = vcmp.lt.s32.totalorder %v106, 1409
    %v108 = vsel %vm107, %v102, %v15
    %s109 = scalar_lea.vmem [#allocation9], 8
    %v110 = vpack.c.bf16 0.0, %v108
    %112 = vst [vmem:[%s109] sm:$0xf] %v110
    %s113 = scalar_lea.vmem %s7, 12
    %s115 = sor.u32 255, 127
    %s116 = sand.u32 %s115, 85
    %s117 = sshrl.u32 %s116, 1
    %s118 = sor.u32 %s116, %s117
    %s119 = sand.u32 51, %s118
    %s120 = sshrl.u32 %s119, 2
    %s121 = sor.u32 %s119, %s120
    %s122 = sand.u32 15, %s121
    %v123 = vld [vmem:[%s113] sm:%s122]
    %v124 = vunpack.c.l.bf16 %v123
    %v125 = vunpack.c.h.bf16 %v123
    %v126 = vlaneseq
    %v127 = vand.u32 %v126, 127
    %v128 = vadd.s32 %v127, 384
    %vm129 = vcmp.lt.s32.totalorder %v128, 1409
    %v130 = vsel %vm129, %v124, %v15
    %s131 = scalar_lea.vmem [#allocation9], 12
    %v132 = vpack.c.bf16 0.0, %v130
    %134 = vst [vmem:[%s131] sm:$0xf] %v132
    %s135 = scalar_lea.vmem %s7, 16
    %s137 = sor.u32 255, 127
    %s138 = sand.u32 %s137, 85
    %s139 = sshrl.u32 %s138, 1
    %s140 = sor.u32 %s138, %s139
    %s141 = sand.u32 51, %s140
    %s142 = sshrl.u32 %s141, 2
    %s143 = sor.u32 %s141, %s142
    %s144 = sand.u32 15, %s143
    %v145 = vld [vmem:[%s135] sm:%s144]
    %v146 = vunpack.c.l.bf16 %v145
    %v147 = vunpack.c.h.bf16 %v145
    %v148 = vlaneseq
    %v149 = vand.u32 %v148, 127
    %v150 = vadd.s32 %v149, 512
    %vm151 = vcmp.lt.s32.totalorder %v150, 1409
    %v152 = vsel %vm151, %v146, %v15
    %s153 = scalar_lea.vmem [#allocation9], 16
    %v154 = vpack.c.bf16 0.0, %v152
    %156 = vst [vmem:[%s153] sm:$0xf] %v154
    %s157 = scalar_lea.vmem %s7, 20
    %s159 = sor.u32 255, 127
    %s160 = sand.u32 %s159, 85
    %s161 = sshrl.u32 %s160, 1
    %s162 = sor.u32 %s160, %s161
    %s163 = sand.u32 51, %s162
    %s164 = sshrl.u32 %s163, 2
    %s165 = sor.u32 %s163, %s164
    %s166 = sand.u32 15, %s165
    %v167 = vld [vmem:[%s157] sm:%s166]
    %v168 = vunpack.c.l.bf16 %v167
    %v169 = vunpack.c.h.bf16 %v167
    %v170 = vlaneseq
    %v171 = vand.u32 %v170, 127
    %v172 = vadd.s32 %v171, 640
    %vm173 = vcmp.lt.s32.totalorder %v172, 1409
    %v174 = vsel %vm173, %v168, %v15
    %s175 = scalar_lea.vmem [#allocation9], 20
    %v176 = vpack.c.bf16 0.0, %v174
    %178 = vst [vmem:[%s175] sm:$0xf] %v176
    %s179 = scalar_lea.vmem %s7, 24
    %s181 = sor.u32 255, 127
    %s182 = sand.u32 %s181, 85
    %s183 = sshrl.u32 %s182, 1
    %s184 = sor.u32 %s182, %s183
    %s185 = sand.u32 51, %s184
    %s186 = sshrl.u32 %s185, 2
    %s187 = sor.u32 %s185, %s186
    %s188 = sand.u32 15, %s187
    %v189 = vld [vmem:[%s179] sm:%s188]
    %v190 = vunpack.c.l.bf16 %v189
    %v191 = vunpack.c.h.bf16 %v189
    %v192 = vlaneseq
    %v193 = vand.u32 %v192, 127
    %v194 = vadd.s32 %v193, 768
    %vm195 = vcmp.lt.s32.totalorder %v194, 1409
    %v196 = vsel %vm195, %v190, %v15
    %s197 = scalar_lea.vmem [#allocation9], 24
    %v198 = vpack.c.bf16 0.0, %v196
    %200 = vst [vmem:[%s197] sm:$0xf] %v198
    %s201 = scalar_lea.vmem %s7, 28
    %s203 = sor.u32 255, 127
    %s204 = sand.u32 %s203, 85
    %s205 = sshrl.u32 %s204, 1
    %s206 = sor.u32 %s204, %s205
    %s207 = sand.u32 51, %s206
    %s208 = sshrl.u32 %s207, 2
    %s209 = sor.u32 %s207, %s208
    %s210 = sand.u32 15, %s209
    %v211 = vld [vmem:[%s201] sm:%s210]
    %v212 = vunpack.c.l.bf16 %v211
    %v213 = vunpack.c.h.bf16 %v211
    %v214 = vlaneseq
    %v215 = vand.u32 %v214, 127
    %v216 = vadd.s32 %v215, 896
    %vm217 = vcmp.lt.s32.totalorder %v216, 1409
    %v218 = vsel %vm217, %v212, %v15
    %s219 = scalar_lea.vmem [#allocation9], 28
    %v220 = vpack.c.bf16 0.0, %v218
    %222 = vst [vmem:[%s219] sm:$0xf] %v220
    %s223 = scalar_lea.vmem %s7, 32
    %s225 = sor.u32 255, 127
    %s226 = sand.u32 %s225, 85
    %s227 = sshrl.u32 %s226, 1
    %s228 = sor.u32 %s226, %s227
    %s229 = sand.u32 51, %s228
    %s230 = sshrl.u32 %s229, 2
    %s231 = sor.u32 %s229, %s230
    %s232 = sand.u32 15, %s231
    %v233 = vld [vmem:[%s223] sm:%s232]
    %v234 = vunpack.c.l.bf16 %v233
    %v235 = vunpack.c.h.bf16 %v233
    %v236 = vlaneseq
    %v237 = vand.u32 %v236, 127
    %v238 = vadd.s32 %v237, 1024
    %vm239 = vcmp.lt.s32.totalorder %v238, 1409
    %v240 = vsel %vm239, %v234, %v15
    %s241 = scalar_lea.vmem [#allocation9], 32
    %v242 = vpack.c.bf16 0.0, %v240
    %244 = vst [vmem:[%s241] sm:$0xf] %v242
    %s245 = scalar_lea.vmem %s7, 36
    %s247 = sor.u32 255, 127
    %s248 = sand.u32 %s247, 85
    %s249 = sshrl.u32 %s248, 1
    %s250 = sor.u32 %s248, %s249
    %s251 = sand.u32 51, %s250
    %s252 = sshrl.u32 %s251, 2
    %s253 = sor.u32 %s251, %s252
    %s254 = sand.u32 15, %s253
    %v255 = vld [vmem:[%s245] sm:%s254]
    %v256 = vunpack.c.l.bf16 %v255
    %v257 = vunpack.c.h.bf16 %v255
    %v258 = vlaneseq
    %v259 = vand.u32 %v258, 127
    %v260 = vadd.s32 %v259, 1152
    %vm261 = vcmp.lt.s32.totalorder %v260, 1409
    %v262 = vsel %vm261, %v256, %v15
    %s263 = scalar_lea.vmem [#allocation9], 36
    %v264 = vpack.c.bf16 0.0, %v262
    %266 = vst [vmem:[%s263] sm:$0xf] %v264
    %s267 = scalar_lea.vmem %s7, 40
    %s269 = sor.u32 255, 127
    %s270 = sand.u32 %s269, 85
    %s271 = sshrl.u32 %s270, 1
    %s272 = sor.u32 %s270, %s271
    %s273 = sand.u32 51, %s272
    %s274 = sshrl.u32 %s273, 2
    %s275 = sor.u32 %s273, %s274
    %s276 = sand.u32 15, %s275
    %v277 = vld [vmem:[%s267] sm:%s276]
    %v278 = vunpack.c.l.bf16 %v277
    %v279 = vunpack.c.h.bf16 %v277
    %v280 = vlaneseq
    %v281 = vand.u32 %v280, 127
    %v282 = vadd.s32 %v281, 1280
    %vm283 = vcmp.lt.s32.totalorder %v282, 1409
    %v284 = vsel %vm283, %v278, %v15
    %s285 = scalar_lea.vmem [#allocation9], 40
    %v286 = vpack.c.bf16 0.0, %v284
    %288 = vst [vmem:[%s285] sm:$0xf] %v286
    %s289 = scalar_lea.vmem %s7, 44
    %s291 = sor.u32 255, 127
    %s292 = sand.u32 %s291, 85
    %s293 = sshrl.u32 %s292, 1
    %s294 = sor.u32 %s292, %s293
    %s295 = sand.u32 51, %s294
    %s296 = sshrl.u32 %s295, 2
    %s297 = sor.u32 %s295, %s296
    %s298 = sand.u32 15, %s297
    %v299 = vld [vmem:[%s289] sm:%s298]
    %v300 = vunpack.c.l.bf16 %v299
    %v301 = vunpack.c.h.bf16 %v299
    %v302 = vlaneseq
    %v303 = vand.u32 %v302, 127
    %v304 = vadd.s32 %v303, 1408
    %vm305 = vcmp.lt.s32.totalorder %v304, 1409
    %v306 = vsel %vm305, %v300, %v15
    %s307 = scalar_lea.vmem [#allocation9], 44
    %v308 = vpack.c.bf16 0.0, %v306
    %310 = vst [vmem:[%s307] sm:$0xf] %v308
    %s311 = scalar_lea.vmem [#allocation9], 48
    %v312 = vpack.c.bf16 0.0, %v15
    %314 = vst [vmem:[%s311] sm:$0xf] %v312
    %s315 = scalar_lea.vmem [#allocation9], 52
    %v316 = vpack.c.bf16 0.0, %v15
    %318 = vst [vmem:[%s315] sm:$0xf] %v316
    %s319 = scalar_lea.vmem [#allocation9], 56
    %v320 = vpack.c.bf16 0.0, %v15
    %322 = vst [vmem:[%s319] sm:$0xf] %v320
    %s323 = scalar_lea.vmem [#allocation9], 60
    %v324 = vpack.c.bf16 0.0, %v15
    %326 = vst [vmem:[%s323] sm:$0xf] %v324
    %s327 = scalar_lea.vmem [#allocation9], 64
    %v328 = vpack.c.bf16 0.0, %v15
    %330 = vst [vmem:[%s327] sm:$0xf] %v328
    %s331 = scalar_lea.vmem [#allocation9], 68
    %v332 = vpack.c.bf16 0.0, %v15
    %334 = vst [vmem:[%s331] sm:$0xf] %v332
    %s335 = scalar_lea.vmem [#allocation9], 72
    %v336 = vpack.c.bf16 0.0, %v15
    %338 = vst [vmem:[%s335] sm:$0xf] %v336
    %s339 = scalar_lea.vmem [#allocation9], 76
    %v340 = vpack.c.bf16 0.0, %v15
    %342 = vst [vmem:[%s339] sm:$0xf] %v340
    %s343 = scalar_lea.vmem [#allocation9], 80
    %v344 = vpack.c.bf16 0.0, %v15
    %346 = vst [vmem:[%s343] sm:$0xf] %v344
    %s347 = scalar_lea.vmem [#allocation9], 84
    %v348 = vpack.c.bf16 0.0, %v15
    %350 = vst [vmem:[%s347] sm:$0xf] %v348
    %s351 = scalar_lea.vmem [#allocation9], 88
    %v352 = vpack.c.bf16 0.0, %v15
    %354 = vst [vmem:[%s351] sm:$0xf] %v352
    %s355 = scalar_lea.vmem [#allocation9], 92
    %v356 = vpack.c.bf16 0.0, %v15
    %358 = vst [vmem:[%s355] sm:$0xf] %v356
    %v360 = vld [vmem:[#allocation9] sm:$0xff]
    %v361 = vld [vmem:[#allocation9 + $0x8] sm:$0xff]
    %v362 = vld [vmem:[#allocation9 + $0x10] sm:$0xff]
    %v363 = vld [vmem:[#allocation9 + $0x18] sm:$0xff]
    %v364 = vld [vmem:[#allocation9 + $0x20] sm:$0xff]
    %v365 = vld [vmem:[#allocation9 + $0x28] sm:$0xff]
    %v366 = vld [vmem:[#allocation9 + $0x30] sm:$0xff]
    %v367 = vld [vmem:[#allocation9 + $0x38] sm:$0xff]
    %v368 = vld [vmem:[#allocation9 + $0x40] sm:$0xff]
    %v369 = vld [vmem:[#allocation9 + $0x48] sm:$0xff]
    %v370 = vld [vmem:[#allocation9 + $0x50] sm:$0xff]
    %v371 = vld [vmem:[#allocation9 + $0x58] sm:$0xff]
    %v372 = vld [vmem:[#allocation7] sm:$0xff]
    %v373 = vld [vmem:[#allocation7 + $0x8] sm:$0xff]
    %v374 = vld [vmem:[#allocation7 + $0x10] sm:$0xff]
    %v375 = vld [vmem:[#allocation7 + $0x18] sm:$0xff]
    %v376 = vld [vmem:[#allocation7 + $0x20] sm:$0xff]
    %v377 = vld [vmem:[#allocation7 + $0x28] sm:$0xff]
    %v378 = vld [vmem:[#allocation7 + $0x30] sm:$0xff]
    %v379 = vld [vmem:[#allocation7 + $0x38] sm:$0xff]
    %v380 = vld [vmem:[#allocation7 + $0x40] sm:$0xff]
    %v381 = vld [vmem:[#allocation7 + $0x48] sm:$0xff]
    %v382 = vld [vmem:[#allocation7 + $0x50] sm:$0xff]
    %v383 = vld [vmem:[#allocation7 + $0x58] sm:$0xff]
    %v384 = vld [vmem:[#allocation7 + $0x60] sm:$0xff]
    %v385 = vld [vmem:[#allocation7 + $0x68] sm:$0xff]
    %v386 = vld [vmem:[#allocation7 + $0x70] sm:$0xff]
    %v387 = vld [vmem:[#allocation7 + $0x78] sm:$0xff]
    %v388 = vld [vmem:[#allocation7 + $0x80] sm:$0xff]
    %v389 = vld [vmem:[#allocation7 + $0x88] sm:$0xff]
    %v390 = vld [vmem:[#allocation7 + $0x90] sm:$0xff]
    %v391 = vld [vmem:[#allocation7 + $0x98] sm:$0xff]
    %v392 = vld [vmem:[#allocation7 + $0xa0] sm:$0xff]
    %v393 = vld [vmem:[#allocation7 + $0xa8] sm:$0xff]
    %v394 = vld [vmem:[#allocation7 + $0xb0] sm:$0xff]
    %v395 = vld [vmem:[#allocation7 + $0xb8] sm:$0xff]
    %v396 = vld [vmem:[#allocation7 + $0xc0] sm:$0xff]
    %v397 = vld [vmem:[#allocation7 + $0xc8] sm:$0xff]
    %v398 = vld [vmem:[#allocation7 + $0xd0] sm:$0xff]
    %v399 = vld [vmem:[#allocation7 + $0xd8] sm:$0xff]
    %v400 = vld [vmem:[#allocation7 + $0xe0] sm:$0xff]
    %v401 = vld [vmem:[#allocation7 + $0xe8] sm:$0xff]
    %v402 = vld [vmem:[#allocation7 + $0xf0] sm:$0xff]
    %v403 = vld [vmem:[#allocation7 + $0xf8] sm:$0xff]
    %v404 = vld [vmem:[#allocation7 + $0x100] sm:$0xff]
    %v405 = vld [vmem:[#allocation7 + $0x108] sm:$0xff]
    %v406 = vld [vmem:[#allocation7 + $0x110] sm:$0xff]
    %v407 = vld [vmem:[#allocation7 + $0x118] sm:$0xff]
    %v408 = vld [vmem:[#allocation7 + $0x120] sm:$0xff]
    %v409 = vld [vmem:[#allocation7 + $0x128] sm:$0xff]
    %v410 = vld [vmem:[#allocation7 + $0x130] sm:$0xff]
    %v411 = vld [vmem:[#allocation7 + $0x138] sm:$0xff]
    %v412 = vld [vmem:[#allocation7 + $0x140] sm:$0xff]
    %v413 = vld [vmem:[#allocation7 + $0x148] sm:$0xff]
    %v414 = vld [vmem:[#allocation7 + $0x150] sm:$0xff]
    %v415 = vld [vmem:[#allocation7 + $0x158] sm:$0xff]
    %v416 = vld [vmem:[#allocation7 + $0x160] sm:$0xff]
    %v417 = vld [vmem:[#allocation7 + $0x168] sm:$0xff]
    %v418 = vld [vmem:[#allocation7 + $0x170] sm:$0xff]
    %v419 = vld [vmem:[#allocation7 + $0x178] sm:$0xff]
    %v420 = vunpack.c.l.s8.bf16 %v372
    %v421 = vunpack.c.h.s8.bf16 %v372
    %v422 = vunpack.c.l.s8.bf16 %v373
    %v423 = vunpack.c.h.s8.bf16 %v373
    %v424 = vunpack.c.l.s8.bf16 %v374
    %v425 = vunpack.c.h.s8.bf16 %v374
    %v426 = vunpack.c.l.s8.bf16 %v375
    %v427 = vunpack.c.h.s8.bf16 %v375
    %v428 = vunpack.c.l.s8.bf16 %v376
    %v429 = vunpack.c.h.s8.bf16 %v376
    %v430 = vunpack.c.l.s8.bf16 %v377
    %v431 = vunpack.c.h.s8.bf16 %v377
    %v432 = vunpack.c.l.s8.bf16 %v378
    %v433 = vunpack.c.h.s8.bf16 %v378
    %v434 = vunpack.c.l.s8.bf16 %v379
    %v435 = vunpack.c.h.s8.bf16 %v379
    %v436 = vunpack.c.l.s8.bf16 %v380
    %v437 = vunpack.c.h.s8.bf16 %v380
    %v438 = vunpack.c.l.s8.bf16 %v381
    %v439 = vunpack.c.h.s8.bf16 %v381
    %v440 = vunpack.c.l.s8.bf16 %v382
    %v441 = vunpack.c.h.s8.bf16 %v382
    %v442 = vunpack.c.l.s8.bf16 %v383
    %v443 = vunpack.c.h.s8.bf16 %v383
    %v444 = vunpack.c.l.s8.bf16 %v384
    %v445 = vunpack.c.h.s8.bf16 %v384
    %v446 = vunpack.c.l.s8.bf16 %v385
    %v447 = vunpack.c.h.s8.bf16 %v385
    %v448 = vunpack.c.l.s8.bf16 %v386
    %v449 = vunpack.c.h.s8.bf16 %v386
    %v450 = vunpack.c.l.s8.bf16 %v387
    %v451 = vunpack.c.h.s8.bf16 %v387
    %v452 = vunpack.c.l.s8.bf16 %v388
    %v453 = vunpack.c.h.s8.bf16 %v388
    %v454 = vunpack.c.l.s8.bf16 %v389
    %v455 = vunpack.c.h.s8.bf16 %v389
    %v456 = vunpack.c.l.s8.bf16 %v390
    %v457 = vunpack.c.h.s8.bf16 %v390
    %v458 = vunpack.c.l.s8.bf16 %v391
    %v459 = vunpack.c.h.s8.bf16 %v391
    %v460 = vunpack.c.l.s8.bf16 %v392
    %v461 = vunpack.c.h.s8.bf16 %v392
    %v462 = vunpack.c.l.s8.bf16 %v393
    %v463 = vunpack.c.h.s8.bf16 %v393
    %v464 = vunpack.c.l.s8.bf16 %v394
    %v465 = vunpack.c.h.s8.bf16 %v394
    %v466 = vunpack.c.l.s8.bf16 %v395
    %v467 = vunpack.c.h.s8.bf16 %v395
    %v468 = vunpack.c.l.s8.bf16 %v396
    %v469 = vunpack.c.h.s8.bf16 %v396
    %v470 = vunpack.c.l.s8.bf16 %v397
    %v471 = vunpack.c.h.s8.bf16 %v397
    %v472 = vunpack.c.l.s8.bf16 %v398
    %v473 = vunpack.c.h.s8.bf16 %v398
    %v474 = vunpack.c.l.s8.bf16 %v399
    %v475 = vunpack.c.h.s8.bf16 %v399
    %v476 = vunpack.c.l.s8.bf16 %v400
    %v477 = vunpack.c.h.s8.bf16 %v400
    %v478 = vunpack.c.l.s8.bf16 %v401
    %v479 = vunpack.c.h.s8.bf16 %v401
    %v480 = vunpack.c.l.s8.bf16 %v402
    %v481 = vunpack.c.h.s8.bf16 %v402
    %v482 = vunpack.c.l.s8.bf16 %v403
    %v483 = vunpack.c.h.s8.bf16 %v403
    %v484 = vunpack.c.l.s8.bf16 %v404
    %v485 = vunpack.c.h.s8.bf16 %v404
    %v486 = vunpack.c.l.s8.bf16 %v405
    %v487 = vunpack.c.h.s8.bf16 %v405
    %v488 = vunpack.c.l.s8.bf16 %v406
    %v489 = vunpack.c.h.s8.bf16 %v406
    %v490 = vunpack.c.l.s8.bf16 %v407
    %v491 = vunpack.c.h.s8.bf16 %v407
    %v492 = vunpack.c.l.s8.bf16 %v408
    %v493 = vunpack.c.h.s8.bf16 %v408
    %v494 = vunpack.c.l.s8.bf16 %v409
    %v495 = vunpack.c.h.s8.bf16 %v409
    %v496 = vunpack.c.l.s8.bf16 %v410
    %v497 = vunpack.c.h.s8.bf16 %v410
    %v498 = vunpack.c.l.s8.bf16 %v411
    %v499 = vunpack.c.h.s8.bf16 %v411
    %v500 = vunpack.c.l.s8.bf16 %v412
    %v501 = vunpack.c.h.s8.bf16 %v412
    %v502 = vunpack.c.l.s8.bf16 %v413
    %v503 = vunpack.c.h.s8.bf16 %v413
    %v504 = vunpack.c.l.s8.bf16 %v414
    %v505 = vunpack.c.h.s8.bf16 %v414
    %v506 = vunpack.c.l.s8.bf16 %v415
    %v507 = vunpack.c.h.s8.bf16 %v415
    %v508 = vunpack.c.l.s8.bf16 %v416
    %v509 = vunpack.c.h.s8.bf16 %v416
    %v510 = vunpack.c.l.s8.bf16 %v417
    %v511 = vunpack.c.h.s8.bf16 %v417
    %v512 = vunpack.c.l.s8.bf16 %v418
    %v513 = vunpack.c.h.s8.bf16 %v418
    %v514 = vunpack.c.l.s8.bf16 %v419
    %v515 = vunpack.c.h.s8.bf16 %v419
    %v528 = vunpack.c.l.b16 %v360
    %v529 = vunpack.c.h.b16 %v360
    %v530 = vunpack.c.l.b16 %v361
    %v531 = vunpack.c.h.b16 %v361
    %v532 = vunpack.c.l.b16 %v362
    %v533 = vunpack.c.h.b16 %v362
    %v534 = vunpack.c.l.b16 %v363
    %v535 = vunpack.c.h.b16 %v363
    %v536 = vunpack.c.l.b16 %v364
    %v537 = vunpack.c.h.b16 %v364
    %v538 = vunpack.c.l.b16 %v365
    %v539 = vunpack.c.h.b16 %v365
    %v540 = vunpack.c.l.b16 %v366
    %v541 = vunpack.c.h.b16 %v366
    %v542 = vunpack.c.l.b16 %v367
    %v543 = vunpack.c.h.b16 %v367
    %v544 = vunpack.c.l.b16 %v368
    %v545 = vunpack.c.h.b16 %v368
    %v546 = vunpack.c.l.b16 %v369
    %v547 = vunpack.c.h.b16 %v369
    %v548 = vunpack.c.l.b16 %v370
    %v549 = vunpack.c.h.b16 %v370
    %v550 = vunpack.c.l.b16 %v371
    %v551 = vunpack.c.h.b16 %v371
    %v552 = vpack.c.b16 %v540, %v528
    %v553 = vpack.c.b16 %v541, %v529
    %v554 = vpack.c.b16 %v542, %v530
    %v555 = vpack.c.b16 %v543, %v531
    %v556 = vpack.c.b16 %v544, %v532
    %v557 = vpack.c.b16 %v545, %v533
    %v558 = vpack.c.b16 %v546, %v534
    %v559 = vpack.c.b16 %v547, %v535
    %v560 = vpack.c.b16 %v548, %v536
    %v561 = vpack.c.b16 %v549, %v537
    %v562 = vpack.c.b16 %v550, %v538
    %v563 = vpack.c.b16 %v551, %v539
    %576 = vmatprep.subr.bf16.mxu0 0
    %577 = vmatpush1.bf16.msra.mxu0 %v420
    %578 = vmatprep.subr.bf16.mxu0 0
    %579 = vmatpush1.bf16.msra.mxu0 %v421
    %580 = vmatprep.subr.bf16.mxu0 0
    %581 = vmatpush1.bf16.msra.mxu0 %v422
    %582 = vmatprep.subr.bf16.mxu0 0
    %583 = vmatpush1.bf16.msra.mxu0 %v423
    %584 = vmatprep.subr.bf16.mxu0 0
    %585 = vmatpush1.bf16.msra.mxu0 %v424
    %586 = vmatprep.subr.bf16.mxu0 0
    %587 = vmatpush1.bf16.msra.mxu0 %v425
    %588 = vmatprep.subr.bf16.mxu0 0
    %589 = vmatpush1.bf16.msra.mxu0 %v426
    %590 = vmatprep.subr.bf16.mxu0 0
    %591 = vmatpush1.bf16.msra.mxu0 %v427
    %592 = vmatprep.subr.bf16.mxu0 0
    %593 = vmatpush1.bf16.msra.mxu0 %v428
    %594 = vmatprep.subr.bf16.mxu0 0
    %595 = vmatpush1.bf16.msra.mxu0 %v429
    %596 = vmatprep.subr.bf16.mxu0 0
    %597 = vmatpush1.bf16.msra.mxu0 %v430
    %598 = vmatprep.subr.bf16.mxu0 0
    %599 = vmatpush1.bf16.msra.mxu0 %v431
    %600 = vmatprep.subr.bf16.mxu0 0
    %601 = vmatpush1.bf16.msra.mxu0 %v432
    %602 = vmatprep.subr.bf16.mxu0 0
    %603 = vmatpush1.bf16.msra.mxu0 %v433
    %604 = vmatprep.subr.bf16.mxu0 0
    %605 = vmatpush1.bf16.msra.mxu0 %v434
    %606 = vmatprep.subr.bf16.mxu0 0
    %607 = vmatpush1.bf16.msra.mxu0 %v435
    %608 = vmatprep.mubr.bf16.mxu0 %v553
    %609 = vmatmul.mubr.bf16.gmra.mrb[0].mxu0 %v552
    %v610 = vpop.f32.mrb[0].mxu0
    %v611 = vadd.f32 0.0, %v610
    %v612 = vpop.f32.mrb[0].mxu0
    %v613 = vpop.f32.mrb[0].mxu0
    %v614 = vadd.f32 0.0, %v613
    %v615 = vpop.f32.mrb[0].mxu0
    %616 = vdwg.mxu0
    %617 = vmatprep.subr.bf16.mxu0 0
    %618 = vmatpush1.bf16.msra.mxu0 %v436
    %619 = vmatprep.subr.bf16.mxu0 0
    %620 = vmatpush1.bf16.msra.mxu0 %v437
    %621 = vmatprep.subr.bf16.mxu0 0
    %622 = vmatpush1.bf16.msra.mxu0 %v438
    %623 = vmatprep.subr.bf16.mxu0 0
    %624 = vmatpush1.bf16.msra.mxu0 %v439
    %625 = vmatprep.subr.bf16.mxu0 0
    %626 = vmatpush1.bf16.msra.mxu0 %v440
    %627 = vmatprep.subr.bf16.mxu0 0
    %628 = vmatpush1.bf16.msra.mxu0 %v441
    %629 = vmatprep.subr.bf16.mxu0 0
    %630 = vmatpush1.bf16.msra.mxu0 %v442
    %631 = vmatprep.subr.bf16.mxu0 0
    %632 = vmatpush1.bf16.msra.mxu0 %v443
    %633 = vmatprep.subr.bf16.mxu0 0
    %634 = vmatpush1.bf16.msra.mxu0 %v444
    %635 = vmatprep.subr.bf16.mxu0 0
    %636 = vmatpush1.bf16.msra.mxu0 %v445
    %637 = vmatprep.subr.bf16.mxu0 0
    %638 = vmatpush1.bf16.msra.mxu0 %v446
    %639 = vmatprep.subr.bf16.mxu0 0
    %640 = vmatpush1.bf16.msra.mxu0 %v447
    %641 = vmatprep.subr.bf16.mxu0 0
    %642 = vmatpush1.bf16.msra.mxu0 %v448
    %643 = vmatprep.subr.bf16.mxu0 0
    %644 = vmatpush1.bf16.msra.mxu0 %v449
    %645 = vmatprep.subr.bf16.mxu0 0
    %646 = vmatpush1.bf16.msra.mxu0 %v450
    %647 = vmatprep.subr.bf16.mxu0 0
    %648 = vmatpush1.bf16.msra.mxu0 %v451
    %649 = vmatprep.mubr.bf16.mxu0 %v555
    %650 = vmatmul.mubr.bf16.gmra.mrb[0].mxu0 %v554
    %v651 = vpop.f32.mrb[0].mxu0
    %v652 = vadd.f32 %v611, %v651
    %v653 = vpop.f32.mrb[0].mxu0
    %v654 = vpop.f32.mrb[0].mxu0
    %v655 = vadd.f32 %v614, %v654
    %v656 = vpop.f32.mrb[0].mxu0
    %657 = vdwg.mxu0
    %658 = vmatprep.subr.bf16.mxu0 0
    %659 = vmatpush1.bf16.msra.mxu0 %v452
    %660 = vmatprep.subr.bf16.mxu0 0
    %661 = vmatpush1.bf16.msra.mxu0 %v453
    %662 = vmatprep.subr.bf16.mxu0 0
    %663 = vmatpush1.bf16.msra.mxu0 %v454
    %664 = vmatprep.subr.bf16.mxu0 0
    %665 = vmatpush1.bf16.msra.mxu0 %v455
    %666 = vmatprep.subr.bf16.mxu0 0
    %667 = vmatpush1.bf16.msra.mxu0 %v456
    %668 = vmatprep.subr.bf16.mxu0 0
    %669 = vmatpush1.bf16.msra.mxu0 %v457
    %670 = vmatprep.subr.bf16.mxu0 0
    %671 = vmatpush1.bf16.msra.mxu0 %v458
    %672 = vmatprep.subr.bf16.mxu0 0
    %673 = vmatpush1.bf16.msra.mxu0 %v459
    %674 = vmatprep.subr.bf16.mxu0 0
    %675 = vmatpush1.bf16.msra.mxu0 %v460
    %676 = vmatprep.subr.bf16.mxu0 0
    %677 = vmatpush1.bf16.msra.mxu0 %v461
    %678 = vmatprep.subr.bf16.mxu0 0
    %679 = vmatpush1.bf16.msra.mxu0 %v462
    %680 = vmatprep.subr.bf16.mxu0 0
    %681 = vmatpush1.bf16.msra.mxu0 %v463
    %682 = vmatprep.subr.bf16.mxu0 0
    %683 = vmatpush1.bf16.msra.mxu0 %v464
    %684 = vmatprep.subr.bf16.mxu0 0
    %685 = vmatpush1.bf16.msra.mxu0 %v465
    %686 = vmatprep.subr.bf16.mxu0 0
    %687 = vmatpush1.bf16.msra.mxu0 %v466
    %688 = vmatprep.subr.bf16.mxu0 0
    %689 = vmatpush1.bf16.msra.mxu0 %v467
    %690 = vmatprep.mubr.bf16.mxu0 %v557
    %691 = vmatmul.mubr.bf16.gmra.mrb[0].mxu0 %v556
    %v692 = vpop.f32.mrb[0].mxu0
    %v693 = vadd.f32 %v652, %v692
    %v694 = vpop.f32.mrb[0].mxu0
    %v695 = vpop.f32.mrb[0].mxu0
    %v696 = vadd.f32 %v655, %v695
    %v697 = vpop.f32.mrb[0].mxu0
    %698 = vdwg.mxu0
    %699 = vmatprep.subr.bf16.mxu0 0
    %700 = vmatpush1.bf16.msra.mxu0 %v468
    %701 = vmatprep.subr.bf16.mxu0 0
    %702 = vmatpush1.bf16.msra.mxu0 %v469
    %703 = vmatprep.subr.bf16.mxu0 0
    %704 = vmatpush1.bf16.msra.mxu0 %v470
    %705 = vmatprep.subr.bf16.mxu0 0
    %706 = vmatpush1.bf16.msra.mxu0 %v471
    %707 = vmatprep.subr.bf16.mxu0 0
    %708 = vmatpush1.bf16.msra.mxu0 %v472
    %709 = vmatprep.subr.bf16.mxu0 0
    %710 = vmatpush1.bf16.msra.mxu0 %v473
    %711 = vmatprep.subr.bf16.mxu0 0
    %712 = vmatpush1.bf16.msra.mxu0 %v474
    %713 = vmatprep.subr.bf16.mxu0 0
    %714 = vmatpush1.bf16.msra.mxu0 %v475
    %715 = vmatprep.subr.bf16.mxu0 0
    %716 = vmatpush1.bf16.msra.mxu0 %v476
    %717 = vmatprep.subr.bf16.mxu0 0
    %718 = vmatpush1.bf16.msra.mxu0 %v477
    %719 = vmatprep.subr.bf16.mxu0 0
    %720 = vmatpush1.bf16.msra.mxu0 %v478
    %721 = vmatprep.subr.bf16.mxu0 0
    %722 = vmatpush1.bf16.msra.mxu0 %v479
    %723 = vmatprep.subr.bf16.mxu0 0
    %724 = vmatpush1.bf16.msra.mxu0 %v480
    %725 = vmatprep.subr.bf16.mxu0 0
    %726 = vmatpush1.bf16.msra.mxu0 %v481
    %727 = vmatprep.subr.bf16.mxu0 0
    %728 = vmatpush1.bf16.msra.mxu0 %v482
    %729 = vmatprep.subr.bf16.mxu0 0
    %730 = vmatpush1.bf16.msra.mxu0 %v483
    %731 = vmatprep.mubr.bf16.mxu0 %v559
    %732 = vmatmul.mubr.bf16.gmra.mrb[0].mxu0 %v558
    %v733 = vpop.f32.mrb[0].mxu0
    %v734 = vadd.f32 %v693, %v733
    %v735 = vpop.f32.mrb[0].mxu0
    %v736 = vpop.f32.mrb[0].mxu0
    %v737 = vadd.f32 %v696, %v736
    %v738 = vpop.f32.mrb[0].mxu0
    %739 = vdwg.mxu0
    %740 = vmatprep.subr.bf16.mxu0 0
    %741 = vmatpush1.bf16.msra.mxu0 %v484
    %742 = vmatprep.subr.bf16.mxu0 0
    %743 = vmatpush1.bf16.msra.mxu0 %v485
    %744 = vmatprep.subr.bf16.mxu0 0
    %745 = vmatpush1.bf16.msra.mxu0 %v486
    %746 = vmatprep.subr.bf16.mxu0 0
    %747 = vmatpush1.bf16.msra.mxu0 %v487
    %748 = vmatprep.subr.bf16.mxu0 0
    %749 = vmatpush1.bf16.msra.mxu0 %v488
    %750 = vmatprep.subr.bf16.mxu0 0
    %751 = vmatpush1.bf16.msra.mxu0 %v489
    %752 = vmatprep.subr.bf16.mxu0 0
    %753 = vmatpush1.bf16.msra.mxu0 %v490
    %754 = vmatprep.subr.bf16.mxu0 0
    %755 = vmatpush1.bf16.msra.mxu0 %v491
    %756 = vmatprep.subr.bf16.mxu0 0
    %757 = vmatpush1.bf16.msra.mxu0 %v492
    %758 = vmatprep.subr.bf16.mxu0 0
    %759 = vmatpush1.bf16.msra.mxu0 %v493
    %760 = vmatprep.subr.bf16.mxu0 0
    %761 = vmatpush1.bf16.msra.mxu0 %v494
    %762 = vmatprep.subr.bf16.mxu0 0
    %763 = vmatpush1.bf16.msra.mxu0 %v495
    %764 = vmatprep.subr.bf16.mxu0 0
    %765 = vmatpush1.bf16.msra.mxu0 %v496
    %766 = vmatprep.subr.bf16.mxu0 0
    %767 = vmatpush1.bf16.msra.mxu0 %v497
    %768 = vmatprep.subr.bf16.mxu0 0
    %769 = vmatpush1.bf16.msra.mxu0 %v498
    %770 = vmatprep.subr.bf16.mxu0 0
    %771 = vmatpush1.bf16.msra.mxu0 %v499
    %772 = vmatprep.mubr.bf16.mxu0 %v561
    %773 = vmatmul.mubr.bf16.gmra.mrb[0].mxu0 %v560
    %v774 = vpop.f32.mrb[0].mxu0
    %v775 = vadd.f32 %v734, %v774
    %v776 = vpop.f32.mrb[0].mxu0
    %v777 = vpop.f32.mrb[0].mxu0
    %v778 = vadd.f32 %v737, %v777
    %v779 = vpop.f32.mrb[0].mxu0
    %780 = vdwg.mxu0
    %781 = vmatprep.subr.bf16.mxu0 0
    %782 = vmatpush1.bf16.msra.mxu0 %v500
    %783 = vmatprep.subr.bf16.mxu0 0
    %784 = vmatpush1.bf16.msra.mxu0 %v501
    %785 = vmatprep.subr.bf16.mxu0 0
    %786 = vmatpush1.bf16.msra.mxu0 %v502
    %787 = vmatprep.subr.bf16.mxu0 0
    %788 = vmatpush1.bf16.msra.mxu0 %v503
    %789 = vmatprep.subr.bf16.mxu0 0
    %790 = vmatpush1.bf16.msra.mxu0 %v504
    %791 = vmatprep.subr.bf16.mxu0 0
    %792 = vmatpush1.bf16.msra.mxu0 %v505
    %793 = vmatprep.subr.bf16.mxu0 0
    %794 = vmatpush1.bf16.msra.mxu0 %v506
    %795 = vmatprep.subr.bf16.mxu0 0
    %796 = vmatpush1.bf16.msra.mxu0 %v507
    %797 = vmatprep.subr.bf16.mxu0 0
    %798 = vmatpush1.bf16.msra.mxu0 %v508
    %799 = vmatprep.subr.bf16.mxu0 0
    %800 = vmatpush1.bf16.msra.mxu0 %v509
    %801 = vmatprep.subr.bf16.mxu0 0
    %802 = vmatpush1.bf16.msra.mxu0 %v510
    %803 = vmatprep.subr.bf16.mxu0 0
    %804 = vmatpush1.bf16.msra.mxu0 %v511
    %805 = vmatprep.subr.bf16.mxu0 0
    %806 = vmatpush1.bf16.msra.mxu0 %v512
    %807 = vmatprep.subr.bf16.mxu0 0
    %808 = vmatpush1.bf16.msra.mxu0 %v513
    %809 = vmatprep.subr.bf16.mxu0 0
    %810 = vmatpush1.bf16.msra.mxu0 %v514
    %811 = vmatprep.subr.bf16.mxu0 0
    %812 = vmatpush1.bf16.msra.mxu0 %v515
    %813 = vmatprep.mubr.bf16.mxu0 %v563
    %814 = vmatmul.mubr.bf16.gmra.mrb[0].mxu0 %v562
    %v815 = vpop.f32.mrb[0].mxu0
    %v816 = vadd.f32 %v775, %v815
    %v817 = vpop.f32.mrb[0].mxu0
    %v818 = vpop.f32.mrb[0].mxu0
    %v819 = vadd.f32 %v778, %v818
    %v820 = vpop.f32.mrb[0].mxu0
    %821 = vdwg.mxu0
    %v822 = vld [vmem:[%s1] sm:$0x1]
    %v824 = vlaneseq
    %v825 = vshrl.u32 %v824, 7
    %v826 = vsub.s32 0, %v825
    %v827 = vrot.slane %v822, %v826
    %v829 = vmul.f32 %v816, %v827
    %v830 = vmul.f32 %v819, %v827
    %v831 = vld [vmem:[%s2] sm:$0x1]
    %v833 = vlaneseq
    %v834 = vshrl.u32 %v833, 7
    %v835 = vsub.s32 0, %v834
    %v836 = vrot.slane %v831, %v835
    %v838 = vadd.f32 %v829, %v836
    %v839 = vadd.f32 %v830, %v836
    %vm840 = vcmp.gt.f32.partialorder %v838, 0.0
    %vm841 = vcmp.gt.f32.partialorder %v839, 0.0
    %v842 = vmul.f32 %v838, 1.442695
    %v843 = vpow.pop %v842
    %v844 = vmul.f32 %v839, 1.442695
    %v845 = vpow.pop %v844
    %v846 = vsub.f32 %v843, 1.0
    %v847 = vsub.f32 %v845, 1.0
    %v848 = vmul.f32 %v846, 1.6732632
    %v849 = vmul.f32 %v847, 1.6732632
    %v850 = vsel %vm840, %v838, %v848
    %v851 = vsel %vm841, %v839, %v849
    %v852 = vmul.f32 %v850, 1.050701
    %v853 = vmul.f32 %v851, 1.050701
    %v854 = vpack.c.bf16 %v853, %v852
    %v855 = vld [vmem:[%s3] sm:$0xf]
    %v856 = vld [vmem:[%s3 + $0x4] sm:$0xf]
    %v857 = vld [vmem:[%s3 + $0x8] sm:$0xf]
    %v858 = vld [vmem:[%s3 + $0xc] sm:$0xf]
    %v859 = vld [vmem:[%s3 + $0x10] sm:$0xf]
    %v860 = vld [vmem:[%s3 + $0x14] sm:$0xf]
    %v861 = vld [vmem:[%s3 + $0x18] sm:$0xf]
    %v862 = vld [vmem:[%s3 + $0x1c] sm:$0xf]
    %v863 = vld [vmem:[%s3 + $0x20] sm:$0xf]
    %v864 = vld [vmem:[%s3 + $0x24] sm:$0xf]
    %v865 = vld [vmem:[%s3 + $0x28] sm:$0xf]
    %v866 = vld [vmem:[%s3 + $0x2c] sm:$0xf]
    %v867 = vld [vmem:[%s3 + $0x30] sm:$0xf]
    %v868 = vld [vmem:[%s3 + $0x34] sm:$0xf]
    %v869 = vld [vmem:[%s3 + $0x38] sm:$0xf]
    %v870 = vld [vmem:[%s3 + $0x3c] sm:$0xf]
    %v871 = vld [vmem:[%s4] sm:$0x1]
    %v873 = vlaneseq
    %v874 = vshrl.u32 %v873, 7
    %v875 = vsub.s32 0, %v874
    %v876 = vrot.slane %v871, %v875
    %v894 = vunpack.c.l.b16 %v855
    %v895 = vunpack.c.l.b16 %v856
    %v896 = vunpack.c.l.b16 %v857
    %v897 = vunpack.c.l.b16 %v858
    %v898 = vunpack.c.l.b16 %v859
    %v899 = vunpack.c.l.b16 %v860
    %v900 = vunpack.c.l.b16 %v861
    %v901 = vunpack.c.l.b16 %v862
    %v902 = vunpack.c.l.b16 %v863
    %v903 = vunpack.c.l.b16 %v864
    %v904 = vunpack.c.l.b16 %v865
    %v905 = vunpack.c.l.b16 %v866
    %v906 = vunpack.c.l.b16 %v867
    %v907 = vunpack.c.l.b16 %v868
    %v908 = vunpack.c.l.b16 %v869
    %v909 = vunpack.c.l.b16 %v870
    %v910 = vpack.c.b16 %v895, %v894
    %v911 = vpack.c.b16 %v897, %v896
    %v912 = vpack.c.b16 %v899, %v898
    %v913 = vpack.c.b16 %v901, %v900
    %v914 = vpack.c.b16 %v903, %v902
    %v915 = vpack.c.b16 %v905, %v904
    %v916 = vpack.c.b16 %v907, %v906
    %v917 = vpack.c.b16 %v909, %v908
    %926 = vmatprep.subr.bf16.mxu0 0
    %927 = vmatpush1.bf16.msra.mxu0 %v910
    %928 = vmatprep.subr.bf16.mxu0 0
    %929 = vmatpush1.bf16.msra.mxu0 %v911
    %930 = vmatprep.subr.bf16.mxu0 0
    %931 = vmatpush1.bf16.msra.mxu0 %v912
    %932 = vmatprep.subr.bf16.mxu0 0
    %933 = vmatpush1.bf16.msra.mxu0 %v913
    %934 = vmatprep.subr.bf16.mxu0 0
    %935 = vmatpush1.bf16.msra.mxu0 %v914
    %936 = vmatprep.subr.bf16.mxu0 0
    %937 = vmatpush1.bf16.msra.mxu0 %v915
    %938 = vmatprep.subr.bf16.mxu0 0
    %939 = vmatpush1.bf16.msra.mxu0 %v916
    %940 = vmatprep.subr.bf16.mxu0 0
    %941 = vmatpush1.bf16.msra.mxu0 %v917
    %942 = vmatprep.subr.bf16.mxu0 0
    %943 = vmatpush1.bf16.msra.mxu0 0
    %944 = vmatprep.subr.bf16.mxu0 0
    %945 = vmatpush1.bf16.msra.mxu0 0
    %946 = vmatprep.subr.bf16.mxu0 0
    %947 = vmatpush1.bf16.msra.mxu0 0
    %948 = vmatprep.subr.bf16.mxu0 0
    %949 = vmatpush1.bf16.msra.mxu0 0
    %950 = vmatprep.subr.bf16.mxu0 0
    %951 = vmatpush1.bf16.msra.mxu0 0
    %952 = vmatprep.subr.bf16.mxu0 0
    %953 = vmatpush1.bf16.msra.mxu0 0
    %954 = vmatprep.subr.bf16.mxu0 0
    %955 = vmatpush1.bf16.msra.mxu0 0
    %956 = vmatprep.subr.bf16.mxu0 0
    %957 = vmatpush1.bf16.msra.mxu0 0
    %958 = vmatprep.mubr.bf16.mxu0 0
    %959 = vmatmul.mubr.bf16.gmra.mrb[0].mxu0 %v854
    %v960 = vpop.f32.mrb[0].mxu0
    %v961 = vadd.f32 %v876, %v960
    %v962 = vpop.f32.mrb[0].mxu0
    %v963 = vpop.f32.mrb[0].mxu0
    %v964 = vadd.f32 %v876, %v963
    %v965 = vpop.f32.mrb[0].mxu0
    %966 = vdwg.mxu0
    %vm967 = vcmp.gt.f32.partialorder %v961, 0.0
    %vm968 = vcmp.gt.f32.partialorder %v964, 0.0
    %v969 = vmul.f32 %v961, 1.442695
    %v970 = vpow.pop %v969
    %v971 = vmul.f32 %v964, 1.442695
    %v972 = vpow.pop %v971
    %v973 = vsub.f32 %v970, 1.0
    %v974 = vsub.f32 %v972, 1.0
    %v975 = vmul.f32 %v973, 1.6732632
    %v976 = vmul.f32 %v974, 1.6732632
    %v977 = vsel %vm967, %v961, %v975
    %v978 = vsel %vm968, %v964, %v976
    %v979 = vmul.f32 %v977, 1.050701
    %v980 = vmul.f32 %v978, 1.050701
    %v981 = vpack.c.bf16 %v980, %v979
    %v982 = vld [vmem:[%s5] sm:$0xf]
    %v983 = vld [vmem:[%s5 + $0x4] sm:$0xf]
    %v984 = vld [vmem:[%s5 + $0x8] sm:$0xf]
    %v985 = vld [vmem:[%s5 + $0xc] sm:$0xf]
    %v986 = vld [vmem:[%s5 + $0x10] sm:$0xf]
    %v987 = vld [vmem:[%s5 + $0x14] sm:$0xf]
    %v988 = vld [vmem:[%s5 + $0x18] sm:$0xf]
    %v989 = vld [vmem:[%s5 + $0x1c] sm:$0xf]
    %v990 = vld [vmem:[%s5 + $0x20] sm:$0xf]
    %v991 = vld [vmem:[%s5 + $0x24] sm:$0xf]
    %v992 = vld [vmem:[%s5 + $0x28] sm:$0xf]
    %v993 = vld [vmem:[%s5 + $0x2c] sm:$0xf]
    %v994 = vld [vmem:[%s5 + $0x30] sm:$0xf]
    %v995 = vld [vmem:[%s5 + $0x34] sm:$0xf]
    %v996 = vld [vmem:[%s5 + $0x38] sm:$0xf]
    %v997 = vld [vmem:[%s5 + $0x3c] sm:$0xf]
    %v998 = vld [vmem:[%s6] sm:$0x1]
    %v1000 = vlaneseq
    %v1001 = vshrl.u32 %v1000, 7
    %v1002 = vsub.s32 0, %v1001
    %v1003 = vrot.slane %v998, %v1002
    %v1021 = vunpack.c.l.b16 %v982
    %v1022 = vunpack.c.l.b16 %v983
    %v1023 = vunpack.c.l.b16 %v984
    %v1024 = vunpack.c.l.b16 %v985
    %v1025 = vunpack.c.l.b16 %v986
    %v1026 = vunpack.c.l.b16 %v987
    %v1027 = vunpack.c.l.b16 %v988
    %v1028 = vunpack.c.l.b16 %v989
    %v1029 = vunpack.c.l.b16 %v990
    %v1030 = vunpack.c.l.b16 %v991
    %v1031 = vunpack.c.l.b16 %v992
    %v1032 = vunpack.c.l.b16 %v993
    %v1033 = vunpack.c.l.b16 %v994
    %v1034 = vunpack.c.l.b16 %v995
    %v1035 = vunpack.c.l.b16 %v996
    %v1036 = vunpack.c.l.b16 %v997
    %v1037 = vpack.c.b16 %v1022, %v1021
    %v1038 = vpack.c.b16 %v1024, %v1023
    %v1039 = vpack.c.b16 %v1026, %v1025
    %v1040 = vpack.c.b16 %v1028, %v1027
    %v1041 = vpack.c.b16 %v1030, %v1029
    %v1042 = vpack.c.b16 %v1032, %v1031
    %v1043 = vpack.c.b16 %v1034, %v1033
    %v1044 = vpack.c.b16 %v1036, %v1035
    %1053 = vmatprep.subr.bf16.mxu0 0
    %1054 = vmatpush1.bf16.msra.mxu0 %v1037
    %1055 = vmatprep.subr.bf16.mxu0 0
    %1056 = vmatpush1.bf16.msra.mxu0 %v1038
    %1057 = vmatprep.subr.bf16.mxu0 0
    %1058 = vmatpush1.bf16.msra.mxu0 %v1039
    %1059 = vmatprep.subr.bf16.mxu0 0
    %1060 = vmatpush1.bf16.msra.mxu0 %v1040
    %1061 = vmatprep.subr.bf16.mxu0 0
    %1062 = vmatpush1.bf16.msra.mxu0 %v1041
    %1063 = vmatprep.subr.bf16.mxu0 0
    %1064 = vmatpush1.bf16.msra.mxu0 %v1042
    %1065 = vmatprep.subr.bf16.mxu0 0
    %1066 = vmatpush1.bf16.msra.mxu0 %v1043
    %1067 = vmatprep.subr.bf16.mxu0 0
    %1068 = vmatpush1.bf16.msra.mxu0 %v1044
    %1069 = vmatprep.subr.bf16.mxu0 0
    %1070 = vmatpush1.bf16.msra.mxu0 0
    %1071 = vmatprep.subr.bf16.mxu0 0
    %1072 = vmatpush1.bf16.msra.mxu0 0
    %1073 = vmatprep.subr.bf16.mxu0 0
    %1074 = vmatpush1.bf16.msra.mxu0 0
    %1075 = vmatprep.subr.bf16.mxu0 0
    %1076 = vmatpush1.bf16.msra.mxu0 0
    %1077 = vmatprep.subr.bf16.mxu0 0
    %1078 = vmatpush1.bf16.msra.mxu0 0
    %1079 = vmatprep.subr.bf16.mxu0 0
    %1080 = vmatpush1.bf16.msra.mxu0 0
    %1081 = vmatprep.subr.bf16.mxu0 0
    %1082 = vmatpush1.bf16.msra.mxu0 0
    %1083 = vmatprep.subr.bf16.mxu0 0
    %1084 = vmatpush1.bf16.msra.mxu0 0
    %1085 = vmatprep.mubr.bf16.mxu0 0
    %1086 = vmatmul.mubr.bf16.gmra.mrb[0].mxu0 %v981
    %v1087 = vpop.f32.mrb[0].mxu0
    %v1088 = vadd.f32 %v1003, %v1087
    %v1089 = vpop.f32.mrb[0].mxu0
    %v1090 = vpop.f32.mrb[0].mxu0
    %v1091 = vadd.f32 %v1003, %v1090
    %v1092 = vpop.f32.mrb[0].mxu0
    %1093 = vdwg.mxu0
    %1094 = vmax.xlane.f32.xlu0 %v1088
    %v1095 = vpop.xlane.xlu0 %1094
    %1096 = vmax.xlane.f32.xlu0 %v1091
    %v1097 = vpop.xlane.xlu0 %1096
    %v1098 = vsub.f32 %v1088, %v1095
    %v1099 = vsub.f32 %v1091, %v1097
    %v1100 = vmul.f32 %v1098, 1.442695
    %v1101 = vpow.pop %v1100
    %v1102 = vmul.f32 %v1099, 1.442695
    %v1103 = vpow.pop %v1102
    %1104 = vadd.xlane.f32.xlu0 %v1101
    %v1105 = vpop.xlane.xlu0 %1104
    %1106 = vadd.xlane.f32.xlu0 %v1103
    %v1107 = vpop.xlane.xlu0 %1106
    %v1108 = vrcp.pop %v1105
    %v1109 = vmul.f32 %v1101, %v1108
    %v1110 = vrcp.pop %v1107
    %v1111 = vmul.f32 %v1103, %v1110
    %1112 = vst [vmem:[%s9] sm:$0xff] %v1109
    %1113 = vst [vmem:[%s9 + $0x8] sm:$0xff] %v1111
    // Predicated region
    $region38: #{dqn_forward_pallas.2} parent=1 // pred_check
      _
    $region39: #{dqn_forward_pallas.2} parent=1 // pred_check_branch
      %1115 = sbr.rel (0) target = $region41
    $region40: #{dqn_forward_pallas.2} parent=1 // pred_region
      _
    $region41: #{dqn_forward_pallas.2} parent=1 // pred_fallthru
      _
    // Predicated region
    $region42: #{dqn_forward_pallas.2} parent=1 // pred_check
      _
    $region43: #{dqn_forward_pallas.2} parent=1 // pred_check_branch
      %1117 = sbr.rel (0) target = $region45
    $region44: #{dqn_forward_pallas.2} parent=1 // pred_region
      _
    $region45: #{dqn_forward_pallas.2} parent=1 // pred_fallthru
      _
    %1118 = vsyncpa [#allocation8], 1

</llo_original>
